<compile_context>
chip_gen: v7x
topology: tpu7x:2x2x1
jax: 0.10.0
libtpu: 0.0.40
codegen_flags: <defaults>
</compile_context>

<pallas_src>
import functools

import jax
import jax.numpy as jnp
from jax.experimental import pallas as pl
from jax.experimental.pallas import tpu as pltpu


def _round_up(v, m):
    return (v + m - 1) // m * m


def _csse_kernel(x_ref, w1t_ref, b1_ref, w2_ref, b2_ref, ws_ref, bs_ref, o_ref,
                 *, inv_hw, unroll_sse):
    """Per-grid-step kernel over a (TB, C, HWp) slab of images.

    Refs:
      x_ref  : (TB, C, HWp)  input images (model dtype), spatial on lanes
      w1t_ref: (C, Cr) f32   fc1 weight, pre-transposed (PyTorch fc1.weight.T)
      b1_ref : (1, Cr) f32   fc1 bias
      w2_ref : (C, Cr) f32   fc2 weight (PyTorch fc2.weight as-is)
      b2_ref : (C, 1)  f32   fc2 bias
      ws_ref : (C, 1)  f32   1x1 conv weight (spatial SE)
      bs_ref : (1, 1)  f32   1x1 conv bias
      o_ref  : (TB, C, HWp)  output images (model dtype)

    inv_hw = 1/(H*W) of the *unpadded* spatial size, so zero-padded lanes
    (HW -> HWp) do not bias the spatial mean.
    """
    tb, c, hwp = x_ref.shape

    def sigmoid(z):
        # exp on the EUP, approximate reciprocal also off the VALU.
        return pl.reciprocal(1.0 + jnp.exp(-z), approx=True)

    x = x_ref[...].astype(jnp.float32)                            # (TB, C, HWp)

    # ---------------- channel SE: squeeze spatially, excite channels --------
    s = jnp.sum(x, axis=2, keepdims=True) * inv_hw                # (TB, C, 1)
    # fc1 (C -> Cr): broadcast-mul + sublane reduce (MXU would be degenerate).
    h = jnp.maximum(
        jnp.sum(s * w1t_ref[...][None, :, :], axis=1, keepdims=True)
        + b1_ref[...][None, :, :],
        0.0)                                                      # (TB, 1, Cr)
    # fc2 (Cr -> C): broadcast-mul + lane reduce.
    g = (jnp.sum(h * w2_ref[...][None, :, :], axis=2, keepdims=True)
         + b2_ref[...][None, :, :])                               # (TB, C, 1)
    scale_c = sigmoid(g)                                          # (TB, C, 1)

    # ---------------- spatial SE: squeeze channels, excite spatially --------
    if unroll_sse:
        # Accumulate channel-by-channel into a (TB, 1, HWp) accumulator so no
        # full (TB, C, HWp) f32 product temporary is materialized in VMEM.
        ws = ws_ref[...]                                          # (C, 1)
        conv = jnp.zeros((tb, 1, hwp), jnp.float32) + bs_ref[...][None, :, :]
        for ci in range(c):                                       # c static, small
            conv = conv + (x_ref[:, ci:ci + 1, :].astype(jnp.float32)
                           * ws[ci:ci + 1, :][None, :, :])
    else:
        # Large C: fused broadcast-mul + sublane reduce (extra block-sized
        # temporary is accounted for in the VMEM budget of the wrapper).
        conv = (jnp.sum(x * ws_ref[...][None, :, :], axis=1, keepdims=True)
                + bs_ref[...][None, :, :])
    scale_s = sigmoid(conv)                                       # (TB, 1, HWp)

    # ---------------- combine: elementwise max of the two excitations -------
    # NOTE: max(x*a, x*b) != x*max(a, b) for negative x -> keep both products.
    o_ref[...] = jnp.maximum(x * scale_c, x * scale_s).astype(o_ref.dtype)


def _pick_batch_tile_and_vmem(B, C, HWp, itemsize):
    """Generation-aware batch-tile (TB) and scoped-VMEM-limit selection.

    Budget per grid step: 2x double-buffered input + 2x double-buffered output
    (model dtype) + ~2 f32 block-sized in-kernel temporaries + vreg-padded
    tiny per-image intermediates. A ~2-8 MiB input block already reaches
    ~85% of HBM roofline, so we cap there instead of filling VMEM.
    """
    c_pad = _round_up(C, 8)
    img_io = c_pad * HWp * itemsize          # one image, I/O dtype, padded layout
    img_f32 = c_pad * HWp * 4                # one image, f32 compute temporaries
    try:
        vmem_cap = int(pltpu.get_tpu_info().vmem_capacity_bytes)
        if vmem_cap <= 0:
            raise ValueError("bad vmem capacity")
    except Exception:
        vmem_cap = 64 * 1024 * 1024          # v7x-safe fallback
    vmem_budget = (vmem_cap * 3) // 4
    per_img = 4 * img_io + 2 * img_f32 + 8 * 4096
    tb_vmem = max(1, vmem_budget // per_img)
    tb_target = max(1, (4 * 1024 * 1024) // img_io)
    tb = int(min(B, tb_vmem, tb_target))
    # ~100 MiB on v5e/v6e (128 MiB VMEM), ~57 MiB on v7x (64 MiB VMEM).
    vmem_limit = int(min((vmem_cap * 9) // 10, 100 * 1024 * 1024))
    return tb, vmem_limit


@jax.jit
def channel_spatial_se(x_nchw, w_fc1, b_fc1, w_fc2, b_fc2, w_conv, b_conv):
    """ChannelSpatialSELayer forward.

    x_nchw : (B, C, H, W)  float dtype kept for I/O (compute in f32)
    w_fc1  : (Cr, C), b_fc1: (Cr,)        -- cSE fc1 (PyTorch Linear layout)
    w_fc2  : (C, Cr), b_fc2: (C,)         -- cSE fc2
    w_conv : (1, C, 1, 1), b_conv: (1,)   -- sSE 1x1 conv
    """
    B, C, H, W = x_nchw.shape
    HW = H * W
    Cr = w_fc1.shape[0]
    dtype = x_nchw.dtype

    # Lane-dense spatial axis: pad HW to a multiple of 128 (unmasked stores).
    HWp = _round_up(HW, 128)
    x = x_nchw.reshape(B, C, HW)
    if HWp != HW:
        x = jnp.pad(x, ((0, 0), (0, 0), (0, HWp - HW)))

    TB, vmem_limit = _pick_batch_tile_and_vmem(
        B, C, HWp, jnp.dtype(dtype).itemsize)
    num_blocks = -(-B // TB)
    B_pad = num_blocks * TB
    if B_pad != B:
        # Padded images are all-zero -> finite math; sliced off below.
        x = jnp.pad(x, ((0, B_pad - B), (0, 0), (0, 0)))

    # Small parameters: f32, shaped for in-kernel broadcasting.
    w1t = jnp.transpose(w_fc1).astype(jnp.float32)                # (C, Cr)
    b1 = b_fc1.reshape(1, Cr).astype(jnp.float32)
    w2 = w_fc2.astype(jnp.float32)                                # (C, Cr)
    b2 = b_fc2.reshape(C, 1).astype(jnp.float32)
    ws = w_conv.reshape(C, 1).astype(jnp.float32)
    bs = b_conv.reshape(1, 1).astype(jnp.float32)

    kernel = functools.partial(
        _csse_kernel, inv_hw=1.0 / HW, unroll_sse=(C <= 32))

    out = pl.pallas_call(
        kernel,
        out_shape=jax.ShapeDtypeStruct((B_pad, C, HWp), dtype),
        grid_spec=pltpu.PrefetchScalarGridSpec(
            num_scalar_prefetch=0,
            grid=(B_pad // TB,),
            in_specs=[
                pl.BlockSpec((TB, C, HWp), lambda i: (i, 0, 0)),  # image slab
                pl.BlockSpec((C, Cr), lambda i: (0, 0)),          # fc1 weight^T
                pl.BlockSpec((1, Cr), lambda i: (0, 0)),          # fc1 bias
                pl.BlockSpec((C, Cr), lambda i: (0, 0)),          # fc2 weight
                pl.BlockSpec((C, 1), lambda i: (0, 0)),           # fc2 bias
                pl.BlockSpec((C, 1), lambda i: (0, 0)),           # sSE conv weight
                pl.BlockSpec((1, 1), lambda i: (0, 0)),           # sSE conv bias
            ],
            out_specs=pl.BlockSpec((TB, C, HWp), lambda i: (i, 0, 0)),
        ),
        compiler_params=pltpu.CompilerParams(
            # Independent batch-tile axis -> split across TCs on multi-core
            # chips; default Buffered(2) pipelining (HBM-bound kernel).
            dimension_semantics=("parallel",),
            vmem_limit_bytes=vmem_limit),
    )(x, w1t, b1, w2, b2, ws, bs)

    return out[:B, :, :HW].reshape(B, C, H, W)


def _reference_forward(x, w_fc1, b_fc1, w_fc2, b_fc2, w_conv, b_conv):
    """Pure-JAX reference matching the PyTorch module."""
    B, C, H, W = x.shape
    # cSE
    s = x.reshape(B, C, -1).mean(axis=2)                          # (B, C)
    h = jnp.maximum(s @ w_fc1.T + b_fc1, 0.0)                     # (B, Cr)
    g = jax.nn.sigmoid(h @ w_fc2.T + b_fc2)                       # (B, C)
    out_c = x * g[:, :, None, None]
    # sSE
    conv = jnp.einsum("bchw,c->bhw", x, w_conv.reshape(C)) + b_conv[0]
    out_s = x * jax.nn.sigmoid(conv)[:, None, :, :]
    return jnp.maximum(out_c, out_s)


if __name__ == "__main__":
    N, C, H, W = 2, 4, 16, 16
    reduction_ratio = 2
    Cr = C // reduction_ratio

    key = jax.random.PRNGKey(0)
    kx, k1, kb1, k2, kb2, kc, kbc = jax.random.split(key, 7)

    x = jax.random.normal(kx, (N, C, H, W), dtype=jnp.float32)
    # PyTorch parameter layouts: Linear.weight (out, in), Conv2d.weight (O, I, kh, kw).
    w_fc1 = 0.5 * jax.random.normal(k1, (Cr, C), dtype=jnp.float32)
    b_fc1 = 0.1 * jax.random.normal(kb1, (Cr,), dtype=jnp.float32)
    w_fc2 = 0.5 * jax.random.normal(k2, (C, Cr), dtype=jnp.float32)
    b_fc2 = 0.1 * jax.random.normal(kb2, (C,), dtype=jnp.float32)
    w_conv = 0.5 * jax.random.normal(kc, (1, C, 1, 1), dtype=jnp.float32)
    b_conv = 0.1 * jax.random.normal(kbc, (1,), dtype=jnp.float32)

    out = channel_spatial_se(x, w_fc1, b_fc1, w_fc2, b_fc2, w_conv, b_conv)
    out = jax.block_until_ready(out)

    ref = _reference_forward(x, w_fc1, b_fc1, w_fc2, b_fc2, w_conv, b_conv)
    assert out.shape == (N, C, H, W)
    # The sigmoid uses the approximate EUP reciprocal, so allow small (<~1e-3
    # relative) deviation from the exact-divide reference.
    assert jnp.allclose(out, ref, atol=2e-2, rtol=1e-2), "mismatch vs reference"

    print("KERNEL_OK")
</pallas_src>

<mosaic_0001>
module attributes {stable_mosaic.version = 11 : i64} {
  func.func @_csse_kernel(%arg0: i32, %arg1: memref<2x4x256xf32, #tpu.memory_space<vmem>>, %arg2: memref<4x2xf32, #tpu.memory_space<vmem>>, %arg3: memref<1x2xf32, #tpu.memory_space<vmem>>, %arg4: memref<4x2xf32, #tpu.memory_space<vmem>>, %arg5: memref<4x1xf32, #tpu.memory_space<vmem>>, %arg6: memref<4x1xf32, #tpu.memory_space<vmem>>, %arg7: memref<1x1xf32, #tpu.memory_space<vmem>>, %arg8: memref<2x4x256xf32, #tpu.memory_space<vmem>>) attributes {dimension_semantics = [#tpu.dimension_semantics<parallel>], iteration_bounds = array<i64: 1>, scalar_prefetch = 0 : i64, scratch_operands = 0 : i64, tpu.core_type = #tpu.core_type<tc>, window_params = [{transform_indices = @transform_0, window_bounds = array<i64: 2, 4, 256>}, {pipeline_mode = #tpu.pipeline_mode<synchronous>, transform_indices = @transform_1, window_bounds = array<i64: 4, 2>}, {pipeline_mode = #tpu.pipeline_mode<synchronous>, transform_indices = @transform_2, window_bounds = array<i64: 1, 2>}, {pipeline_mode = #tpu.pipeline_mode<synchronous>, transform_indices = @transform_3, window_bounds = array<i64: 4, 2>}, {pipeline_mode = #tpu.pipeline_mode<synchronous>, transform_indices = @transform_4, window_bounds = array<i64: 4, 1>}, {pipeline_mode = #tpu.pipeline_mode<synchronous>, transform_indices = @transform_5, window_bounds = array<i64: 4, 1>}, {pipeline_mode = #tpu.pipeline_mode<synchronous>, transform_indices = @transform_6, window_bounds = array<i64: 1, 1>}, {transform_indices = @transform_7, window_bounds = array<i64: 2, 4, 256>}]} {
    %c0 = arith.constant 0 : index
    %c0_0 = arith.constant 0 : index
    %c0_1 = arith.constant 0 : index
    %0 = vector.load %arg1[%c0, %c0_0, %c0_1] : memref<2x4x256xf32, #tpu.memory_space<vmem>>, vector<2x4x256xf32>
    %cst = arith.constant dense<0.000000e+00> : vector<2x4xf32>
    %1 = vector.multi_reduction <add>, %0, %cst [2] : vector<2x4x256xf32> to vector<2x4xf32>
    %2 = vector.shape_cast %1 : vector<2x4xf32> to vector<2x4x1xf32>
    %cst_2 = arith.constant 3.906250e-03 : f32
    %3 = vector.broadcast %cst_2 : f32 to vector<2x4x1xf32>
    %4 = arith.mulf %2, %3 : vector<2x4x1xf32>
    %c0_3 = arith.constant 0 : index
    %c0_4 = arith.constant 0 : index
    %5 = vector.load %arg2[%c0_3, %c0_4] : memref<4x2xf32, #tpu.memory_space<vmem>>, vector<4x2xf32>
    %6 = vector.shape_cast %5 : vector<4x2xf32> to vector<1x4x2xf32>
    %7 = vector.broadcast %4 : vector<2x4x1xf32> to vector<2x4x2xf32>
    %8 = vector.broadcast %6 : vector<1x4x2xf32> to vector<2x4x2xf32>
    %9 = arith.mulf %7, %8 : vector<2x4x2xf32>
    %cst_5 = arith.constant dense<0.000000e+00> : vector<2x2xf32>
    %10 = vector.multi_reduction <add>, %9, %cst_5 [1] : vector<2x4x2xf32> to vector<2x2xf32>
    %11 = vector.shape_cast %10 : vector<2x2xf32> to vector<2x1x2xf32>
    %c0_6 = arith.constant 0 : index
    %c0_7 = arith.constant 0 : index
    %12 = vector.load %arg3[%c0_6, %c0_7] : memref<1x2xf32, #tpu.memory_space<vmem>>, vector<1x2xf32>
    %13 = vector.shape_cast %12 : vector<1x2xf32> to vector<1x1x2xf32>
    %14 = vector.broadcast %13 : vector<1x1x2xf32> to vector<2x1x2xf32>
    %15 = arith.addf %11, %14 : vector<2x1x2xf32>
    %cst_8 = arith.constant 0.000000e+00 : f32
    %16 = vector.broadcast %cst_8 : f32 to vector<2x1x2xf32>
    %17 = arith.maximumf %15, %16 : vector<2x1x2xf32>
    %c0_9 = arith.constant 0 : index
    %c0_10 = arith.constant 0 : index
    %18 = vector.load %arg4[%c0_9, %c0_10] : memref<4x2xf32, #tpu.memory_space<vmem>>, vector<4x2xf32>
    %19 = vector.shape_cast %18 : vector<4x2xf32> to vector<1x4x2xf32>
    %20 = vector.broadcast %17 : vector<2x1x2xf32> to vector<2x4x2xf32>
    %21 = vector.broadcast %19 : vector<1x4x2xf32> to vector<2x4x2xf32>
    %22 = arith.mulf %20, %21 : vector<2x4x2xf32>
    %cst_11 = arith.constant dense<0.000000e+00> : vector<2x4xf32>
    %23 = vector.multi_reduction <add>, %22, %cst_11 [2] : vector<2x4x2xf32> to vector<2x4xf32>
    %24 = vector.shape_cast %23 : vector<2x4xf32> to vector<2x4x1xf32>
    %c0_12 = arith.constant 0 : index
    %c0_13 = arith.constant 0 : index
    %25 = vector.load %arg5[%c0_12, %c0_13] : memref<4x1xf32, #tpu.memory_space<vmem>>, vector<4x1xf32>
    %26 = vector.shape_cast %25 : vector<4x1xf32> to vector<1x4x1xf32>
    %27 = vector.broadcast %26 : vector<1x4x1xf32> to vector<2x4x1xf32>
    %28 = arith.addf %24, %27 : vector<2x4x1xf32>
    %cst_14 = arith.constant 0.000000e+00 : f32
    %29 = vector.broadcast %cst_14 : f32 to vector<2x4x1xf32>
    %30 = arith.subf %29, %28 : vector<2x4x1xf32>
    %31 = math.exp %30 : vector<2x4x1xf32>
    %cst_15 = arith.constant 1.000000e+00 : f32
    %32 = vector.broadcast %cst_15 : f32 to vector<2x4x1xf32>
    %33 = arith.addf %32, %31 : vector<2x4x1xf32>
    %34 = tpu.reciprocal %33 {approx = true} : vector<2x4x1xf32> -> vector<2x4x1xf32>
    %c0_16 = arith.constant 0 : index
    %c0_17 = arith.constant 0 : index
    %35 = vector.load %arg6[%c0_16, %c0_17] : memref<4x1xf32, #tpu.memory_space<vmem>>, vector<4x1xf32>
    %cst_18 = arith.constant 0.000000e+00 : f32
    %36 = vector.broadcast %cst_18 : f32 to vector<2x1x256xf32>
    %c0_19 = arith.constant 0 : index
    %c0_20 = arith.constant 0 : index
    %37 = vector.load %arg7[%c0_19, %c0_20] : memref<1x1xf32, #tpu.memory_space<vmem>>, vector<1x1xf32>
    %38 = vector.shape_cast %37 : vector<1x1xf32> to vector<1x1x1xf32>
    %39 = vector.broadcast %38 : vector<1x1x1xf32> to vector<2x1x256xf32>
    %40 = arith.addf %36, %39 : vector<2x1x256xf32>
    %c0_21 = arith.constant 0 : index
    %c0_22 = arith.constant 0 : index
    %c0_23 = arith.constant 0 : index
    %41 = vector.load %arg1[%c0_21, %c0_22, %c0_23] : memref<2x4x256xf32, #tpu.memory_space<vmem>>, vector<2x1x256xf32>
    %42 = vector.extract_strided_slice %35 {offsets = [0, 0], sizes = [1, 1], strides = [1, 1]} : vector<4x1xf32> to vector<1x1xf32>
    %43 = vector.shape_cast %42 : vector<1x1xf32> to vector<1x1x1xf32>
    %44 = vector.broadcast %43 : vector<1x1x1xf32> to vector<2x1x256xf32>
    %45 = arith.mulf %41, %44 : vector<2x1x256xf32>
    %46 = arith.addf %40, %45 : vector<2x1x256xf32>
    %c0_24 = arith.constant 0 : index
    %c1 = arith.constant 1 : index
    %c0_25 = arith.constant 0 : index
    %47 = vector.load %arg1[%c0_24, %c1, %c0_25] : memref<2x4x256xf32, #tpu.memory_space<vmem>>, vector<2x1x256xf32>
    %48 = vector.extract_strided_slice %35 {offsets = [1, 0], sizes = [1, 1], strides = [1, 1]} : vector<4x1xf32> to vector<1x1xf32>
    %49 = vector.shape_cast %48 : vector<1x1xf32> to vector<1x1x1xf32>
    %50 = vector.broadcast %49 : vector<1x1x1xf32> to vector<2x1x256xf32>
    %51 = arith.mulf %47, %50 : vector<2x1x256xf32>
    %52 = arith.addf %46, %51 : vector<2x1x256xf32>
    %c0_26 = arith.constant 0 : index
    %c2 = arith.constant 2 : index
    %c0_27 = arith.constant 0 : index
    %53 = vector.load %arg1[%c0_26, %c2, %c0_27] : memref<2x4x256xf32, #tpu.memory_space<vmem>>, vector<2x1x256xf32>
    %54 = vector.extract_strided_slice %35 {offsets = [2, 0], sizes = [1, 1], strides = [1, 1]} : vector<4x1xf32> to vector<1x1xf32>
    %55 = vector.shape_cast %54 : vector<1x1xf32> to vector<1x1x1xf32>
    %56 = vector.broadcast %55 : vector<1x1x1xf32> to vector<2x1x256xf32>
    %57 = arith.mulf %53, %56 : vector<2x1x256xf32>
    %58 = arith.addf %52, %57 : vector<2x1x256xf32>
    %c0_28 = arith.constant 0 : index
    %c3 = arith.constant 3 : index
    %c0_29 = arith.constant 0 : index
    %59 = vector.load %arg1[%c0_28, %c3, %c0_29] : memref<2x4x256xf32, #tpu.memory_space<vmem>>, vector<2x1x256xf32>
    %60 = vector.extract_strided_slice %35 {offsets = [3, 0], sizes = [1, 1], strides = [1, 1]} : vector<4x1xf32> to vector<1x1xf32>
    %61 = vector.shape_cast %60 : vector<1x1xf32> to vector<1x1x1xf32>
    %62 = vector.broadcast %61 : vector<1x1x1xf32> to vector<2x1x256xf32>
    %63 = arith.mulf %59, %62 : vector<2x1x256xf32>
    %64 = arith.addf %58, %63 : vector<2x1x256xf32>
    %cst_30 = arith.constant 0.000000e+00 : f32
    %65 = vector.broadcast %cst_30 : f32 to vector<2x1x256xf32>
    %66 = arith.subf %65, %64 : vector<2x1x256xf32>
    %67 = math.exp %66 : vector<2x1x256xf32>
    %cst_31 = arith.constant 1.000000e+00 : f32
    %68 = vector.broadcast %cst_31 : f32 to vector<2x1x256xf32>
    %69 = arith.addf %68, %67 : vector<2x1x256xf32>
    %70 = tpu.reciprocal %69 {approx = true} : vector<2x1x256xf32> -> vector<2x1x256xf32>
    %71 = vector.broadcast %34 : vector<2x4x1xf32> to vector<2x4x256xf32>
    %72 = arith.mulf %0, %71 : vector<2x4x256xf32>
    %73 = vector.broadcast %70 : vector<2x1x256xf32> to vector<2x4x256xf32>
    %74 = arith.mulf %0, %73 : vector<2x4x256xf32>
    %75 = arith.maximumf %72, %74 : vector<2x4x256xf32>
    %c0_32 = arith.constant 0 : index
    %c0_33 = arith.constant 0 : index
    %c0_34 = arith.constant 0 : index
    %76 = vector.load %arg8[%c0_32, %c0_33, %c0_34] : memref<2x4x256xf32, #tpu.memory_space<vmem>>, vector<2x4x256xf32>
    tpu.vector_store %arg8[%c0_32, %c0_33, %c0_34], %75 {strides = array<i32>} : memref<2x4x256xf32, #tpu.memory_space<vmem>>, vector<2x4x256xf32>,
    return
  }
  func.func @transform_0(%arg0: i32) -> (i32, i32, i32) {
    %c0_i32 = arith.constant 0 : i32
    %c0_i32_0 = arith.constant 0 : i32
    %c0_i32_1 = arith.constant 0 : i32
    return %arg0, %c0_i32, %c0_i32_0 : i32, i32, i32
  }
  func.func @transform_1(%arg0: i32) -> (i32, i32) {
    %c0_i32 = arith.constant 0 : i32
    %c0_i32_0 = arith.constant 0 : i32
    %c0_i32_1 = arith.constant 0 : i32
    return %c0_i32, %c0_i32_0 : i32, i32
  }
  func.func @transform_2(%arg0: i32) -> (i32, i32) {
    %c0_i32 = arith.constant 0 : i32
    %c0_i32_0 = arith.constant 0 : i32
    %c0_i32_1 = arith.constant 0 : i32
    return %c0_i32, %c0_i32_0 : i32, i32
  }
  func.func @transform_3(%arg0: i32) -> (i32, i32) {
    %c0_i32 = arith.constant 0 : i32
    %c0_i32_0 = arith.constant 0 : i32
    %c0_i32_1 = arith.constant 0 : i32
    return %c0_i32, %c0_i32_0 : i32, i32
  }
  func.func @transform_4(%arg0: i32) -> (i32, i32) {
    %c0_i32 = arith.constant 0 : i32
    %c0_i32_0 = arith.constant 0 : i32
    %c0_i32_1 = arith.constant 0 : i32
    return %c0_i32, %c0_i32_0 : i32, i32
  }
  func.func @transform_5(%arg0: i32) -> (i32, i32) {
    %c0_i32 = arith.constant 0 : i32
    %c0_i32_0 = arith.constant 0 : i32
    %c0_i32_1 = arith.constant 0 : i32
    return %c0_i32, %c0_i32_0 : i32, i32
  }
  func.func @transform_6(%arg0: i32) -> (i32, i32) {
    %c0_i32 = arith.constant 0 : i32
    %c0_i32_0 = arith.constant 0 : i32
    %c0_i32_1 = arith.constant 0 : i32
    return %c0_i32, %c0_i32_0 : i32, i32
  }
  func.func @transform_7(%arg0: i32) -> (i32, i32, i32) {
    %c0_i32 = arith.constant 0 : i32
    %c0_i32_0 = arith.constant 0 : i32
    %c0_i32_1 = arith.constant 0 : i32
    return %arg0, %c0_i32, %c0_i32_0 : i32, i32, i32
  }
}

</mosaic_0001>

<llo_original>
// kernel: channel_spatial_se.1
$region0: #{channel_spatial_se.1}
  #allocation0 [shape = 'u32[]', space=smem, size = 0x4, offset = 0x4, fixed_abs, tag = 'smem constant byte address 0x4 - core index']
  #allocation1 [shape = 'u32[144,128]{1,0:T(1,128)}', space=vmem, size = 0x12000, scoped, tag = 'internal scratch']
  #allocation2 [shape = 'f32[1,1]{1,0:T(1,128)S(1)}', space=vmem, size = 0x200, scoped, tag = 'scoped memory for channel_spatial_se.1']
  %s0 = inlined_call_operand.vmem [shape: f32[2,4,256], index: 0, kind: input, shape index: {}]
  %s1 = inlined_call_operand.vmem [shape: f32[4,2], index: 1, kind: input, shape index: {}]
  %s2 = inlined_call_operand.vmem [shape: f32[1,2], index: 2, kind: input, shape index: {}]
  %s3 = inlined_call_operand.vmem [shape: f32[4,2], index: 3, kind: input, shape index: {}]
  %s4 = inlined_call_operand.vmem [shape: f32[4,1], index: 4, kind: input, shape index: {}]
  %s5 = inlined_call_operand.vmem [shape: f32[4,1], index: 5, kind: input, shape index: {}]
  %s6 = inlined_call_operand.<no memory space> [shape: f32[1,1], index: 6, kind: input, shape index: {}]
  %s7 = inlined_call_operand.vmem [shape: f32[2,4,256], index: 7, kind: output, shape index: {}]
  %s8 = sld [smem:[#allocation0]]
  $region38: #{channel_spatial_se.1} parent=0
    _
  %s10 = ssub.s32 1, %s8
  %s11 = scalar_select 0, %s10, %s8
  %v12 = vstv %s6
  %13 = vst [vmem:[#allocation2] sm:$0x1] %v12
  // Predicated region
  $region2: #{channel_spatial_se.1} parent=0 // pred_check
    _
  $region3: #{channel_spatial_se.1} parent=0 // pred_check_branch
    %15 = sbr.rel (0) target = $region5
  $region4: #{channel_spatial_se.1} parent=0 // pred_region
    _
  $region5: #{channel_spatial_se.1} parent=0 // pred_fallthru
    _
  // Predicated region
  $region6: #{channel_spatial_se.1} parent=0 // pred_check
    _
  $region7: #{channel_spatial_se.1} parent=0 // pred_check_branch
    %17 = sbr.rel (0) target = $region9
  $region8: #{channel_spatial_se.1} parent=0 // pred_region
    _
  $region9: #{channel_spatial_se.1} parent=0 // pred_fallthru
    _
  // Predicated region
  $region10: #{channel_spatial_se.1} parent=0 // pred_check
    _
  $region11: #{channel_spatial_se.1} parent=0 // pred_check_branch
    %19 = sbr.rel (0) target = $region13
  $region12: #{channel_spatial_se.1} parent=0 // pred_region
    _
  $region13: #{channel_spatial_se.1} parent=0 // pred_fallthru
    _
  // Predicated region
  $region14: #{channel_spatial_se.1} parent=0 // pred_check
    _
  $region15: #{channel_spatial_se.1} parent=0 // pred_check_branch
    %21 = sbr.rel (0) target = $region17
  $region16: #{channel_spatial_se.1} parent=0 // pred_region
    _
  $region17: #{channel_spatial_se.1} parent=0 // pred_fallthru
    _
  // Predicated region
  $region18: #{channel_spatial_se.1} parent=0 // pred_check
    _
  $region19: #{channel_spatial_se.1} parent=0 // pred_check_branch
    %23 = sbr.rel (0) target = $region21
  $region20: #{channel_spatial_se.1} parent=0 // pred_region
    _
  $region21: #{channel_spatial_se.1} parent=0 // pred_fallthru
    _
  // Predicated region
  $region22: #{channel_spatial_se.1} parent=0 // pred_check
    _
  $region23: #{channel_spatial_se.1} parent=0 // pred_check_branch
    %25 = sbr.rel (0) target = $region25
  $region24: #{channel_spatial_se.1} parent=0 // pred_region
    _
  $region25: #{channel_spatial_se.1} parent=0 // pred_fallthru
    _
  // Predicated region
  $region26: #{channel_spatial_se.1} parent=0 // pred_check
    _
  $region27: #{channel_spatial_se.1} parent=0 // pred_check_branch
    %27 = sbr.rel (0) target = $region29
  $region28: #{channel_spatial_se.1} parent=0 // pred_region
    _
  $region29: #{channel_spatial_se.1} parent=0 // pred_fallthru
    _
  %v28 = vld [vmem:[%s0] sm:$0xff]
  %v29 = vld [vmem:[%s0 + $0x8] sm:$0xff]
  %v32 = vcombine.high %v28, %v28
  %v33 = vcombine.high %v29, %v29
  %vm36 = vcmask 1043456
  %v37 = vsel %vm36, %v28, 0.0
  %v38 = vsel %vm36, %v32, 0.0
  %v39 = vadd.f32 %v37, %v38
  %40 = vadd.xlane.f32.xlu0 %v39
  %v41 = vpop.xlane.xlu0 %40
  %v42 = vsel %vm36, %v29, 0.0
  %v43 = vsel %vm36, %v33, 0.0
  %v44 = vadd.f32 %v42, %v43
  %45 = vadd.xlane.f32.xlu0 %v44
  %v46 = vpop.xlane.xlu0 %45
  %v47 = vmul.f32 %v41, 0.00390625
  %v48 = vmul.f32 %v46, 0.00390625
  %v49 = vld [vmem:[%s1] sm:$0xf]
  %v50 = vmul.f32 %v47, %v49
  %v51 = vmul.f32 %v48, %v49
  %vm52 = vcmask 11264
  %v53 = vsel %vm52, %v50, 0.0
  %v54 = vrot.slane %v53, 4
  %v55 = vadd.f32 %v53, %v54
  %v56 = vrot.slane %v55, 2
  %v57 = vadd.f32 %v55, %v56
  %v58 = vrot.slane %v57, 1
  %v59 = vadd.f32 %v57, %v58
  %v60 = vsel %vm52, %v51, 0.0
  %v61 = vrot.slane %v60, 4
  %v62 = vadd.f32 %v60, %v61
  %v63 = vrot.slane %v62, 2
  %v64 = vadd.f32 %v62, %v63
  %v65 = vrot.slane %v64, 1
  %v66 = vadd.f32 %v64, %v65
  %v67 = vld [vmem:[%s2] sm:$0x1]
  %v68 = vadd.f32 %v59, %v67
  %v69 = vadd.f32 %v66, %v67
  %v70 = vmax.f32 %v68, 0.0
  %v71 = vmax.f32 %v69, 0.0
  %v72 = vld [vmem:[%s3] sm:$0xf]
  %v73 = vlaneseq
  %v74 = vshrl.u32 %v73, 7
  %v75 = vsub.s32 0, %v74
  %v76 = vrot.slane %v70, %v75
  %v77 = vlaneseq
  %v78 = vshrl.u32 %v77, 7
  %v79 = vsub.s32 0, %v78
  %v80 = vrot.slane %v71, %v79
  %v81 = vmul.f32 %v76, %v72
  %v82 = vmul.f32 %v80, %v72
  %v83 = vsel %vm52, %v81, 0.0
  %84 = vadd.xlane.f32.xlu0 %v83
  %v85 = vpop.xlane.xlu0 %84
  %v86 = vsel %vm52, %v82, 0.0
  %87 = vadd.xlane.f32.xlu0 %v86
  %v88 = vpop.xlane.xlu0 %87
  %v89 = vld [vmem:[%s4] sm:$0xf]
  %v90 = vadd.f32 %v85, %v89
  %v91 = vadd.f32 %v88, %v89
  %v92 = vsub.f32 0.0, %v90
  %v93 = vsub.f32 0.0, %v91
  %v94 = vmul.f32 %v92, 1.442695
  %v95 = vpow.pop %v94
  %v96 = vmul.f32 %v93, 1.442695
  %v97 = vpow.pop %v96
  %v98 = vadd.f32 %v95, 1.0
  %v99 = vadd.f32 %v97, 1.0
  %v100 = vrcp.pop %v98
  %v101 = vrcp.pop %v99
  %v102 = vld [vmem:[%s5] sm:$0xf]
  %v103 = vld [vmem:[#allocation2] sm:$0x1]
  %105 = vset.pattern.permute.xlu0 0
  %106 = vperm.xlu0 %105, %v103
  %v107 = vpop.permute.xlu0 %106
  %v109 = vlaneseq
  %v110 = vshrl.u32 %v109, 7
  %v111 = vsub.s32 0, %v110
  %v112 = vrot.slane %v107, %v111
  %v113 = vadd.f32 %v112, 0.0
  %v114 = vld [vmem:[%s0] ss:$4 sm:$0x3]
  %s115 = scalar_lea.vmem %s0, 8
  %v116 = vld [vmem:[%s115] ss:$4 sm:$0x3]
  %118 = vset.pattern.permute.xlu0 0
  %119 = vperm.xlu0 %118, %v102
  %v120 = vpop.permute.xlu0 %119
  %v121 = vlaneseq
  %v122 = vshrl.u32 %v121, 7
  %v123 = vsub.s32 0, %v122
  %v124 = vrot.slane %v120, %v123
  %v126 = vmul.f32 %v114, %v124
  %v127 = vmul.f32 %v116, %v124
  %v128 = vadd.f32 %v113, %v126
  %v129 = vadd.f32 %v113, %v127
  %s130 = scalar_lea.vmem %s0, 1
  %v131 = vld [vmem:[%s130] ss:$4 sm:$0x3]
  %s132 = scalar_lea.vmem %s0, 9
  %v133 = vld [vmem:[%s132] ss:$4 sm:$0x3]
  %v134 = vlaneseq
  %v135 = vshrl.u32 %v134, 7
  %v136 = vsub.s32 1, %v135
  %v137 = vrot.slane %v120, %v136
  %v139 = vmul.f32 %v131, %v137
  %v140 = vmul.f32 %v133, %v137
  %v141 = vadd.f32 %v128, %v139
  %v142 = vadd.f32 %v129, %v140
  %s143 = scalar_lea.vmem %s0, 2
  %v144 = vld [vmem:[%s143] ss:$4 sm:$0x3]
  %s145 = scalar_lea.vmem %s0, 10
  %v146 = vld [vmem:[%s145] ss:$4 sm:$0x3]
  %v147 = vlaneseq
  %v148 = vshrl.u32 %v147, 7
  %v149 = vsub.s32 2, %v148
  %v150 = vrot.slane %v120, %v149
  %v152 = vmul.f32 %v144, %v150
  %v153 = vmul.f32 %v146, %v150
  %v154 = vadd.f32 %v141, %v152
  %v155 = vadd.f32 %v142, %v153
  %s156 = scalar_lea.vmem %s0, 3
  %v157 = vld [vmem:[%s156] ss:$4 sm:$0x3]
  %s158 = scalar_lea.vmem %s0, 11
  %v159 = vld [vmem:[%s158] ss:$4 sm:$0x3]
  %v160 = vlaneseq
  %v161 = vshrl.u32 %v160, 7
  %v162 = vsub.s32 3, %v161
  %v163 = vrot.slane %v120, %v162
  %v165 = vmul.f32 %v157, %v163
  %v166 = vmul.f32 %v159, %v163
  %v167 = vadd.f32 %v154, %v165
  %v168 = vadd.f32 %v155, %v166
  %v169 = vsub.f32 0.0, %v167
  %v170 = vsub.f32 0.0, %v168
  %v171 = vmul.f32 %v169, 1.442695
  %v172 = vpow.pop %v171
  %v173 = vmul.f32 %v170, 1.442695
  %v174 = vpow.pop %v173
  %v175 = vadd.f32 %v172, 1.0
  %v176 = vadd.f32 %v174, 1.0
  %v177 = vrcp.pop %v175
  %v178 = vrcp.pop %v176
  %180 = vset.pattern.permute.xlu0 0
  %181 = vperm.xlu0 %180, %v100
  %v182 = vpop.permute.xlu0 %181
  %184 = vset.pattern.permute.xlu0 0
  %185 = vperm.xlu0 %184, %v101
  %v186 = vpop.permute.xlu0 %185
  %v188 = vunpack.c.l.s4 839922192
  %v189 = vunpack.c.0.s8 %v188
  %v190 = vlaneseq
  %v191 = vshrl.u32 %v190, 7
  %v192 = vsub.s32 %v189, %v191
  %v193 = vrot.slane %v182, %v192
  %v195 = vunpack.c.l.s4 839922192
  %v196 = vunpack.c.0.s8 %v195
  %v197 = vlaneseq
  %v198 = vshrl.u32 %v197, 7
  %v199 = vsub.s32 %v196, %v198
  %v200 = vrot.slane %v186, %v199
  %v203 = vmul.f32 %v28, %v193
  %v204 = vmul.f32 %v29, %v200
  %v207 = vlaneseq
  %v208 = vshrl.u32 %v207, 7
  %v209 = vsub.s32 0, %v208
  %v210 = vrot.slane %v177, %v209
  %v211 = vlaneseq
  %v212 = vshrl.u32 %v211, 7
  %v213 = vsub.s32 1, %v212
  %v214 = vrot.slane %v177, %v213
  %v215 = vlaneseq
  %v216 = vshrl.u32 %v215, 7
  %v217 = vsub.s32 0, %v216
  %v218 = vrot.slane %v178, %v217
  %v219 = vlaneseq
  %v220 = vshrl.u32 %v219, 7
  %v221 = vsub.s32 1, %v220
  %v222 = vrot.slane %v178, %v221
  %v223 = vcombine.low %v210, %v214
  %v224 = vcombine.low %v218, %v222
  %v227 = vmul.f32 %v28, %v223
  %v228 = vmul.f32 %v29, %v224
  %v229 = vmax.f32 %v203, %v227
  %v230 = vmax.f32 %v204, %v228
  %231 = vst [vmem:[%s7] sm:$0xff] %v229
  %232 = vst [vmem:[%s7 + $0x8] sm:$0xff] %v230
  // Predicated region
  $region30: #{channel_spatial_se.1} parent=0 // pred_check
    _
  $region31: #{channel_spatial_se.1} parent=0 // pred_check_branch
    %234 = sbr.rel (0) target = $region33
  $region32: #{channel_spatial_se.1} parent=0 // pred_region
    _
  $region33: #{channel_spatial_se.1} parent=0 // pred_fallthru
    _
  // Predicated region
  $region34: #{channel_spatial_se.1} parent=0 // pred_check
    _
  $region35: #{channel_spatial_se.1} parent=0 // pred_check_branch
    %236 = sbr.rel (0) target = $region37
  $region36: #{channel_spatial_se.1} parent=0 // pred_region
    _
  $region37: #{channel_spatial_se.1} parent=0 // pred_fallthru
    _

</llo_original>
